<compile_context>
chip_gen: v7x
topology: tpu7x:2x2x1
jax: 0.10.0
libtpu: 0.0.40
codegen_flags: <defaults>
</compile_context>

<pallas_src>
import functools

import jax
import jax.numpy as jnp
from jax.experimental import pallas as pl
from jax.experimental.pallas import tpu as pltpu


def mnet_kernel(x_ref, w_ref, o_ref):
    # Linear(d_feature, 1, bias=False): per-row inner product as a (TM,D)@(D,1)
    # matmul. Output last dim is 1 (masked vst) — acceptable because the kernel
    # is HBM-bandwidth-bound, not store-bound.
    o_ref[...] = jnp.dot(
        x_ref[...], w_ref[...], preferred_element_type=jnp.float32
    ).astype(o_ref.dtype)


def _round_up(v, m):
    return ((v + m - 1) // m) * m


def _pick_tm(batch, d_feature, dtype_bytes, max_tile_bytes=8 * 1024 * 1024):
    """Largest batch tile (multiple of 8, <=1024) whose x slab stays under the
    per-buffer VMEM cap that is safe across v5e/v6e/v7x with double buffering."""
    tm = max_tile_bytes // max(1, d_feature * dtype_bytes)
    tm = min(tm, 1024, _round_up(batch, 8))
    tm = max(8, (tm // 8) * 8)
    return tm


@functools.partial(jax.jit, static_argnames=("use_bf16",))
def mnet_forward(x, w_t, *, use_bf16=False):
    """x: (B, D), w_t: (D, 1) -> (B, 1), dtype follows x.

    use_bf16=True halves HBM bytes read (memory-bound win on all generations);
    accumulation remains f32 inside the kernel.
    """
    out_dtype = x.dtype
    if use_bf16:
        x = x.astype(jnp.bfloat16)
        w_t = w_t.astype(jnp.bfloat16)

    B, D = x.shape
    dtype_bytes = jnp.dtype(x.dtype).itemsize
    TM = _pick_tm(B, D, dtype_bytes)
    grid = (pl.cdiv(B, TM),)

    return pl.pallas_call(
        mnet_kernel,
        out_shape=jax.ShapeDtypeStruct((B, 1), out_dtype),
        grid_spec=pl.GridSpec(
            grid=grid,
            in_specs=[
                # x: tiled over batch, full feature width (no D sub-tiling).
                pl.BlockSpec((TM, D), lambda i: (i, 0)),
                # w: constant index_map -> stays resident across batch tiles.
                pl.BlockSpec((D, 1), lambda i: (0, 0)),
            ],
            out_specs=pl.BlockSpec((TM, 1), lambda i: (i, 0)),
        ),
        compiler_params=pltpu.CompilerParams(
            # Independent batch tiles: shard across both TCs on v7x.
            dimension_semantics=("parallel",),
            # Headroom above the 16/32 MiB scoped defaults, still safe on
            # v7x's 64 MiB physical VMEM with the <=8 MiB per-buffer cap.
            vmem_limit_bytes=48 * 1024 * 1024,
        ),
    )(x, w_t)


if __name__ == "__main__":
    key = jax.random.PRNGKey(0)
    k_x, k_w = jax.random.split(key)

    # Small shapes consistent with the module. NOTE: at this size a standalone
    # pallas_call is dominated by launch overhead — it exists to demonstrate
    # correctness; the tiling above is what matters at realistic (B, D).
    batch = 8
    d_feature = 32

    x = jax.random.normal(k_x, (batch, d_feature), dtype=jnp.float32)
    # torch.nn.init.uniform_ -> U[0, 1); weight shape (1, d_feature), stored transposed.
    w = jax.random.uniform(k_w, (1, d_feature), dtype=jnp.float32)
    w_t = w.T  # (d_feature, 1)

    z = mnet_forward(x, w_t)
    jax.block_until_ready(z)

    # Sanity check against plain JAX reference.
    z_ref = x @ w_t
    assert z.shape == (batch, 1)
    assert jnp.allclose(z, z_ref, atol=1e-5, rtol=1e-5)

    print("KERNEL_OK")
</pallas_src>

<mosaic_0001>
module attributes {stable_mosaic.version = 11 : i64} {
  func.func @mnet_kernel(%arg0: i32, %arg1: memref<8x32xf32, #tpu.memory_space<vmem>>, %arg2: memref<32x1xf32, #tpu.memory_space<vmem>>, %arg3: memref<8x1xf32, #tpu.memory_space<vmem>>) attributes {dimension_semantics = [#tpu.dimension_semantics<parallel>], iteration_bounds = array<i64: 1>, scalar_prefetch = 0 : i64, scratch_operands = 0 : i64, tpu.core_type = #tpu.core_type<tc>, window_params = [{transform_indices = @transform_0, window_bounds = array<i64: 8, 32>}, {pipeline_mode = #tpu.pipeline_mode<synchronous>, transform_indices = @transform_1, window_bounds = array<i64: 32, 1>}, {transform_indices = @transform_2, window_bounds = array<i64: 8, 1>}]} {
    %c0 = arith.constant 0 : index
    %c0_0 = arith.constant 0 : index
    %0 = vector.load %arg1[%c0, %c0_0] : memref<8x32xf32, #tpu.memory_space<vmem>>, vector<8x32xf32>
    %c0_1 = arith.constant 0 : index
    %c0_2 = arith.constant 0 : index
    %1 = vector.load %arg2[%c0_1, %c0_2] : memref<32x1xf32, #tpu.memory_space<vmem>>, vector<32x1xf32>
    %cst = arith.constant dense<0.000000e+00> : vector<8x1xf32>
    %2 = tpu.matmul %0, %1, %cst {dimension_numbers = #tpu.dot_dimension_numbers<[1], [0], [0], [1], [0, 0, 1, 1], [], []>} : vector<8x32xf32>, vector<32x1xf32>, vector<8x1xf32> -> vector<8x1xf32>
    %c0_3 = arith.constant 0 : index
    %c0_4 = arith.constant 0 : index
    %3 = vector.load %arg3[%c0_3, %c0_4] : memref<8x1xf32, #tpu.memory_space<vmem>>, vector<8x1xf32>
    tpu.vector_store %arg3[%c0_3, %c0_4], %2 {strides = array<i32>} : memref<8x1xf32, #tpu.memory_space<vmem>>, vector<8x1xf32>,
    return
  }
  func.func @transform_0(%arg0: i32) -> (i32, i32) {
    %c0_i32 = arith.constant 0 : i32
    %c0_i32_0 = arith.constant 0 : i32
    return %arg0, %c0_i32 : i32, i32
  }
  func.func @transform_1(%arg0: i32) -> (i32, i32) {
    %c0_i32 = arith.constant 0 : i32
    %c0_i32_0 = arith.constant 0 : i32
    %c0_i32_1 = arith.constant 0 : i32
    return %c0_i32, %c0_i32_0 : i32, i32
  }
  func.func @transform_2(%arg0: i32) -> (i32, i32) {
    %c0_i32 = arith.constant 0 : i32
    %c0_i32_0 = arith.constant 0 : i32
    return %arg0, %c0_i32 : i32, i32
  }
}

</mosaic_0001>

<llo_original>
// kernel: mnet_forward.1
$region0: #{mnet_forward.1}
  #allocation0 [shape = 'u32[]', space=smem, size = 0x4, offset = 0x4, fixed_abs, tag = 'smem constant byte address 0x4 - core index']
  #allocation1 [shape = 'u32[144,128]{1,0:T(1,128)}', space=vmem, size = 0x12000, scoped, tag = 'internal scratch']
  %s0 = inlined_call_operand.vmem [shape: f32[8,32], index: 0, kind: input, shape index: {}]
  %s1 = inlined_call_operand.vmem [shape: f32[32,1], index: 1, kind: input, shape index: {}]
  %s2 = inlined_call_operand.vmem [shape: f32[8,1], index: 2, kind: output, shape index: {}]
  %s3 = sld [smem:[#allocation0]]
  $region18: #{mnet_forward.1} parent=0
    _
  %s5 = ssub.s32 1, %s3
  %s6 = scalar_select 0, %s5, %s3
  // Predicated region
  $region2: #{mnet_forward.1} parent=0 // pred_check
    _
  $region3: #{mnet_forward.1} parent=0 // pred_check_branch
    %8 = sbr.rel (0) target = $region5
  $region4: #{mnet_forward.1} parent=0 // pred_region
    _
  $region5: #{mnet_forward.1} parent=0 // pred_fallthru
    _
  // Predicated region
  $region6: #{mnet_forward.1} parent=0 // pred_check
    _
  $region7: #{mnet_forward.1} parent=0 // pred_check_branch
    %10 = sbr.rel (0) target = $region9
  $region8: #{mnet_forward.1} parent=0 // pred_region
    _
  $region9: #{mnet_forward.1} parent=0 // pred_fallthru
    _
  %v11 = vld [vmem:[%s0] sm:$0xff]
  %v12 = vld [vmem:[%s1] sm:$0xff]
  %v13 = vld [vmem:[%s1 + $0x8] sm:$0xff]
  %v14 = vld [vmem:[%s1 + $0x10] sm:$0xff]
  %v15 = vld [vmem:[%s1 + $0x18] sm:$0xff]
  %vm16 = vcmask 261120
  %v18 = vsel %vm16, %v11, 0
  %20 = vmatprep.subr.mxu0 0.0
  %21 = vmatpush1.msra.mxu0 %v12
  %22 = vmatprep.subr.mxu0 0.0
  %23 = vmatpush1.msra.mxu0 %v13
  %24 = vmatprep.subr.mxu0 0.0
  %25 = vmatpush1.msra.mxu0 %v14
  %26 = vmatprep.subr.mxu0 0.0
  %27 = vmatpush1.msra.mxu0 %v15
  %28 = vmatprep.subr.mxu0 0.0
  %29 = vmatpush1.msra.mxu0 0.0
  %30 = vmatprep.subr.mxu0 0.0
  %31 = vmatpush1.msra.mxu0 0.0
  %32 = vmatprep.subr.mxu0 0.0
  %33 = vmatpush1.msra.mxu0 0.0
  %34 = vmatprep.subr.mxu0 0.0
  %35 = vmatpush1.msra.mxu0 0.0
  %36 = vmatprep.subr.mxu0 0.0
  %37 = vmatpush1.msra.mxu0 0.0
  %38 = vmatprep.subr.mxu0 0.0
  %39 = vmatpush1.msra.mxu0 0.0
  %40 = vmatprep.subr.mxu0 0.0
  %41 = vmatpush1.msra.mxu0 0.0
  %42 = vmatprep.subr.mxu0 0.0
  %43 = vmatpush1.msra.mxu0 0.0
  %44 = vmatprep.subr.mxu0 0.0
  %45 = vmatpush1.msra.mxu0 0.0
  %46 = vmatprep.subr.mxu0 0.0
  %47 = vmatpush1.msra.mxu0 0.0
  %48 = vmatprep.subr.mxu0 0.0
  %49 = vmatpush1.msra.mxu0 0.0
  %50 = vmatprep.subr.mxu0 0.0
  %51 = vmatpush1.msra.mxu0 0.0
  %52 = vmatprep.subr.mxu0 0.0
  %53 = vmatpush1.msra.mxu0 0.0
  %54 = vmatprep.subr.mxu0 0.0
  %55 = vmatpush1.msra.mxu0 0.0
  %56 = vmatprep.subr.mxu0 0.0
  %57 = vmatpush1.msra.mxu0 0.0
  %58 = vmatprep.subr.mxu0 0.0
  %59 = vmatpush1.msra.mxu0 0.0
  %60 = vmatprep.subr.mxu0 0.0
  %61 = vmatpush1.msra.mxu0 0.0
  %62 = vmatprep.subr.mxu0 0.0
  %63 = vmatpush1.msra.mxu0 0.0
  %64 = vmatprep.subr.mxu0 0.0
  %65 = vmatpush1.msra.mxu0 0.0
  %66 = vmatprep.subr.mxu0 0.0
  %67 = vmatpush1.msra.mxu0 0.0
  %68 = vmatprep.subr.mxu0 0.0
  %69 = vmatpush1.msra.mxu0 0.0
  %70 = vmatprep.subr.mxu0 0.0
  %71 = vmatpush1.msra.mxu0 0.0
  %72 = vmatprep.subr.mxu0 0.0
  %73 = vmatpush1.msra.mxu0 0.0
  %74 = vmatprep.subr.mxu0 0.0
  %75 = vmatpush1.msra.mxu0 0.0
  %76 = vmatprep.subr.mxu0 0.0
  %77 = vmatpush1.msra.mxu0 0.0
  %78 = vmatprep.subr.mxu0 0.0
  %79 = vmatpush1.msra.mxu0 0.0
  %80 = vmatprep.subr.mxu0 0.0
  %81 = vmatpush1.msra.mxu0 0.0
  %82 = vmatprep.subr.mxu0 0.0
  %83 = vmatpush1.msra.mxu0 0.0
  %84 = vmatprep.mubr.f32.mxu0 0.0
  %85 = vmatmul.mubr.f32.gmra.mrb[0].mxu0 %v18
  %v86 = vpop.f32.mrb[0].mxu0
  %v87 = vadd.f32 0.0, %v86
  %v88 = vpop.f32.mrb[0].mxu0
  %89 = vdwg.mxu0
  %vm90 = vcmask 7168
  %91 = vst.msk [vmem:[%s2] sm:$0xff] %vm90, %v87
  // Predicated region
  $region10: #{mnet_forward.1} parent=0 // pred_check
    _
  $region11: #{mnet_forward.1} parent=0 // pred_check_branch
    %93 = sbr.rel (0) target = $region13
  $region12: #{mnet_forward.1} parent=0 // pred_region
    _
  $region13: #{mnet_forward.1} parent=0 // pred_fallthru
    _
  // Predicated region
  $region14: #{mnet_forward.1} parent=0 // pred_check
    _
  $region15: #{mnet_forward.1} parent=0 // pred_check_branch
    %95 = sbr.rel (0) target = $region17
  $region16: #{mnet_forward.1} parent=0 // pred_region
    _
  $region17: #{mnet_forward.1} parent=0 // pred_fallthru
    _

</llo_original>
